<compile_context>
chip_gen: v6e
topology: v6e:2x2x1
jax: 0.10.0
libtpu: 0.0.40
codegen_flags: <defaults>
</compile_context>

<pallas_src>
import numpy as np
import jax
import jax.numpy as jnp
from jax.experimental import pallas as pl
from jax.experimental.pallas import tpu as pltpu

NCPAD = 128   # classes padded to a full lane width (lane-dense store)


# ------------------------------- kernel --------------------------------------
def _cbam_head_kernel(x_ref, w1_ref, w2_ref, cm_ref, fcwt_ref, fcb_ref, o_ref):
    """One batch element per grid step.

    x_ref   : [C, HW]       extracted features for this batch element
    w1_ref  : [CR, C]       channel-attn fc1 (1x1 conv, no bias)
    w2_ref  : [C, CR]       channel-attn fc2 (1x1 conv, no bias)
    cm_ref  : [2*HW, HW]    Toeplitz of the 7x7 spatial conv (avg rows, max rows)
    fcwt_ref: [C, NCPAD]    classifier weight (transposed, class-padded)
    fcb_ref : [1, NCPAD]    classifier bias (class-padded)
    o_ref   : [1, NCPAD]    padded logits for this batch element
    """
    f32 = jnp.float32
    x = x_ref[...]                                        # [C, HW]
    hw = x.shape[1]
    inv_hw = 1.0 / hw

    # ---------------- Channel attention ----------------
    avg_c = jnp.sum(x, axis=1, keepdims=True) * inv_hw    # [C, 1]  (lane reduce)
    max_c = jnp.max(x, axis=1, keepdims=True)             # [C, 1]  (lane reduce)

    def shared_mlp(v):                                    # [C, 1] -> [C, 1]
        h = jnp.maximum(
            jnp.dot(w1_ref[...], v, preferred_element_type=f32), 0.0)  # [CR, 1]
        return jnp.dot(w2_ref[...], h, preferred_element_type=f32)     # [C, 1]

    ca = jax.nn.sigmoid(shared_mlp(avg_c) + shared_mlp(max_c))         # [C, 1]
    x1 = x * ca                                           # broadcast over lanes

    # -------- Spatial attention (7x7 conv as one Toeplitz matmul) --------
    ch_avg = jnp.mean(x1, axis=0, keepdims=True)          # [1, HW] (sublane reduce)
    ch_max = jnp.max(x1, axis=0, keepdims=True)           # [1, HW]
    stats = jnp.concatenate([ch_avg, ch_max], axis=1)     # [1, 2*HW]
    sa = jax.nn.sigmoid(jnp.dot(stats, cm_ref[...],
                                preferred_element_type=f32))            # [1, HW]
    x2 = x1 * sa                                          # broadcast over channels

    # ---------- global avg pool + classifier (dropout = identity at eval) -----
    pooled = jnp.sum(x2, axis=1, keepdims=True) * inv_hw  # [C, 1]
    logits = jax.lax.dot_general(pooled, fcwt_ref[...],
                                 (((0,), (0,)), ((), ())),
                                 preferred_element_type=f32) + fcb_ref[...]  # [1, NCPAD]
    o_ref[...] = logits


# -------------------------- host-side precompute (once, at init) --------------
def _build_conv_toeplitz(wsa_np, H, W):
    """[2, KS, KS] conv weights -> [2*HW, HW] Toeplitz (pad=KS//2, stride=1)."""
    KS = wsa_np.shape[-1]
    PAD = KS // 2
    HW = H * W
    T = np.zeros((2, HW, HW), np.float32)
    oy, ox = np.meshgrid(np.arange(H), np.arange(W), indexing="ij")
    o_idx = (oy * W + ox).reshape(-1)
    for ky in range(KS):
        iy = (oy + ky - PAD).reshape(-1)
        for kx in range(KS):
            ix = (ox + kx - PAD).reshape(-1)
            valid = (iy >= 0) & (iy < H) & (ix >= 0) & (ix < W)
            rows = iy[valid] * W + ix[valid]
            cols = o_idx[valid]
            for c in range(2):
                T[c, rows, cols] += wsa_np[c, ky, kx]
    return T.reshape(2 * HW, HW)


def make_cbam_head(w1, w2, wsa, fcw, fcb, *, spatial_hw):
    """Build device constants once (model init); return a jitted apply(x_bchw)."""
    H, W = spatial_hw
    HW = H * W
    CR, C = w1.shape
    num_classes = fcw.shape[0]
    ncpad = ((num_classes + NCPAD - 1) // NCPAD) * NCPAD

    cm = jnp.asarray(_build_conv_toeplitz(np.asarray(wsa, np.float32), H, W))
    fcwt_pad = jnp.pad(jnp.asarray(fcw, jnp.float32).T,
                       ((0, 0), (0, ncpad - num_classes)))       # [C, ncpad]
    fcb_pad = jnp.pad(jnp.asarray(fcb, jnp.float32).reshape(1, num_classes),
                      ((0, 0), (0, ncpad - num_classes)))        # [1, ncpad]
    w1d = jnp.asarray(w1, jnp.float32)
    w2d = jnp.asarray(w2, jnp.float32)
    # TODO(synk): at real B0 sizes (C=1280) cast the matmul operands
    # (x, w1, w2, cm, fcwt) to bf16 (f32 accumulation via preferred_element_type)
    # for MXU throughput and halved VMEM/DMA; kept f32 here for exact parity.

    @jax.jit
    def apply(x_bchw):
        B = x_bchw.shape[0]
        # contiguous reshape only -- no transpose, no extra HBM round trip
        x = x_bchw.astype(jnp.float32).reshape(B, C, HW)
        grid_spec = pltpu.PrefetchScalarGridSpec(
            num_scalar_prefetch=0,
            grid=(B,),
            in_specs=[
                pl.BlockSpec((pl.Squeezed(), C, HW), lambda b: (b, 0, 0)),
                pl.BlockSpec((CR, C), lambda b: (0, 0)),
                pl.BlockSpec((C, CR), lambda b: (0, 0)),
                pl.BlockSpec((2 * HW, HW), lambda b: (0, 0)),
                pl.BlockSpec((C, ncpad), lambda b: (0, 0)),
                pl.BlockSpec((1, ncpad), lambda b: (0, 0)),
            ],
            out_specs=pl.BlockSpec((pl.Squeezed(), 1, ncpad), lambda b: (b, 0, 0)),
        )
        out_pad = pl.pallas_call(
            _cbam_head_kernel,
            out_shape=jax.ShapeDtypeStruct((B, 1, ncpad), jnp.float32),
            grid_spec=grid_spec,
            compiler_params=pltpu.CompilerParams(
                dimension_semantics=("parallel",)),
        )(x, w1d, w2d, cm, fcwt_pad, fcb_pad)
        return out_pad[:, 0, :num_classes]

    return apply


# ------------------------------ reference ------------------------------------
def reference(x_nchw, w1, w2, wsa, fcw, fcb):
    pad = wsa.shape[-1] // 2
    avg = x_nchw.mean(axis=(2, 3))                      # [B, C]
    mx = x_nchw.max(axis=(2, 3))                        # [B, C]

    def fc(v):
        return jnp.maximum(v @ w1.T, 0.0) @ w2.T

    ca = jax.nn.sigmoid(fc(avg) + fc(mx))               # [B, C]
    x1 = x_nchw * ca[:, :, None, None]

    ch_avg = x1.mean(axis=1, keepdims=True)
    ch_max = x1.max(axis=1, keepdims=True)
    cat = jnp.concatenate([ch_avg, ch_max], axis=1)     # [B, 2, H, W]
    conv = jax.lax.conv_general_dilated(
        cat, wsa[None], window_strides=(1, 1),
        padding=((pad, pad), (pad, pad)),
        dimension_numbers=("NCHW", "OIHW", "NCHW"))
    sa = jax.nn.sigmoid(conv)                           # [B, 1, H, W]
    x2 = x1 * sa

    pooled = x2.mean(axis=(2, 3))                       # [B, C]
    return pooled @ fcw.T + fcb                         # [B, num_classes]


# --------------------------------- main ---------------------------------------
if __name__ == "__main__":
    B, C, H, W = 2, 64, 8, 8          # C = conv_head.out_channels stand-in (1280 in real B0)
    RED, KS, NUM_CLASSES = 16, 7, 3

    key = jax.random.PRNGKey(0)
    kx, k1, k2, k3, k4, k5 = jax.random.split(key, 6)

    x = jax.random.normal(kx, (B, C, H, W), jnp.float32)              # extracted features
    w1 = jax.random.normal(k1, (C // RED, C), jnp.float32) * 0.1      # Conv2d(C, C//16, 1)
    w2 = jax.random.normal(k2, (C, C // RED), jnp.float32) * 0.1      # Conv2d(C//16, C, 1)
    wsa = jax.random.normal(k3, (2, KS, KS), jnp.float32) * 0.1       # Conv2d(2, 1, 7)
    fcw = jax.random.normal(k4, (NUM_CLASSES, C), jnp.float32) * 0.1  # Linear(C, 3)
    fcb = jax.random.normal(k5, (NUM_CLASSES,), jnp.float32) * 0.1

    head = make_cbam_head(w1, w2, wsa, fcw, fcb, spatial_hw=(H, W))   # constants built once
    out = jax.block_until_ready(head(x))
    ref = jax.block_until_ready(reference(x, w1, w2, wsa, fcw, fcb))

    assert out.shape == (B, NUM_CLASSES)
    assert jnp.allclose(out, ref, rtol=1e-4, atol=1e-4), (out, ref)
    print("KERNEL_OK")
</pallas_src>

<mosaic_0001>
module attributes {stable_mosaic.version = 11 : i64} {
  func.func @_cbam_head_kernel(%arg0: i32, %arg1: memref<1x64x64xf32, #tpu.memory_space<vmem>>, %arg2: memref<4x64xf32, #tpu.memory_space<vmem>>, %arg3: memref<64x4xf32, #tpu.memory_space<vmem>>, %arg4: memref<128x64xf32, #tpu.memory_space<vmem>>, %arg5: memref<64x128xf32, #tpu.memory_space<vmem>>, %arg6: memref<1x128xf32, #tpu.memory_space<vmem>>, %arg7: memref<1x1x128xf32, #tpu.memory_space<vmem>>) attributes {dimension_semantics = [#tpu.dimension_semantics<parallel>], iteration_bounds = array<i64: 2>, scalar_prefetch = 0 : i64, scratch_operands = 0 : i64, tpu.core_type = #tpu.core_type<tc>, window_params = [{transform_indices = @transform_0, window_bounds = array<i64: 1, 64, 64>}, {pipeline_mode = #tpu.pipeline_mode<synchronous>, transform_indices = @transform_1, window_bounds = array<i64: 4, 64>}, {pipeline_mode = #tpu.pipeline_mode<synchronous>, transform_indices = @transform_2, window_bounds = array<i64: 64, 4>}, {pipeline_mode = #tpu.pipeline_mode<synchronous>, transform_indices = @transform_3, window_bounds = array<i64: 128, 64>}, {pipeline_mode = #tpu.pipeline_mode<synchronous>, transform_indices = @transform_4, window_bounds = array<i64: 64, 128>}, {pipeline_mode = #tpu.pipeline_mode<synchronous>, transform_indices = @transform_5, window_bounds = array<i64: 1, 128>}, {transform_indices = @transform_6, window_bounds = array<i64: 1, 1, 128>}]} {
    %c0 = arith.constant 0 : index
    %c0_0 = arith.constant 0 : index
    %c0_1 = arith.constant 0 : index
    %0 = vector.load %arg1[%c0, %c0_0, %c0_1] : memref<1x64x64xf32, #tpu.memory_space<vmem>>, vector<1x64x64xf32>
    %1 = vector.shape_cast %0 : vector<1x64x64xf32> to vector<64x64xf32>
    %cst = arith.constant dense<0.000000e+00> : vector<64xf32>
    %2 = vector.multi_reduction <add>, %1, %cst [1] : vector<64x64xf32> to vector<64xf32>
    %3 = vector.shape_cast %2 : vector<64xf32> to vector<64x1xf32>
    %cst_2 = arith.constant 1.562500e-02 : f32
    %4 = vector.broadcast %cst_2 : f32 to vector<64x1xf32>
    %5 = arith.mulf %3, %4 : vector<64x1xf32>
    %cst_3 = arith.constant dense<0xFF800000> : vector<64xf32>
    %6 = vector.multi_reduction <maximumf>, %1, %cst_3 [1] : vector<64x64xf32> to vector<64xf32>
    %7 = vector.shape_cast %6 : vector<64xf32> to vector<64x1xf32>
    %c0_4 = arith.constant 0 : index
    %c0_5 = arith.constant 0 : index
    %8 = vector.load %arg2[%c0_4, %c0_5] : memref<4x64xf32, #tpu.memory_space<vmem>>, vector<4x64xf32>
    %cst_6 = arith.constant dense<0.000000e+00> : vector<4x1xf32>
    %9 = tpu.matmul %8, %5, %cst_6 {dimension_numbers = #tpu.dot_dimension_numbers<[1], [0], [0], [1], [0, 0, 1, 1], [], []>} : vector<4x64xf32>, vector<64x1xf32>, vector<4x1xf32> -> vector<4x1xf32>
    %cst_7 = arith.constant 0.000000e+00 : f32
    %10 = vector.broadcast %cst_7 : f32 to vector<4x1xf32>
    %11 = arith.maximumf %9, %10 : vector<4x1xf32>
    %c0_8 = arith.constant 0 : index
    %c0_9 = arith.constant 0 : index
    %12 = vector.load %arg3[%c0_8, %c0_9] : memref<64x4xf32, #tpu.memory_space<vmem>>, vector<64x4xf32>
    %cst_10 = arith.constant dense<0.000000e+00> : vector<64x1xf32>
    %13 = tpu.matmul %12, %11, %cst_10 {dimension_numbers = #tpu.dot_dimension_numbers<[1], [0], [0], [1], [0, 0, 1, 1], [], []>} : vector<64x4xf32>, vector<4x1xf32>, vector<64x1xf32> -> vector<64x1xf32>
    %c0_11 = arith.constant 0 : index
    %c0_12 = arith.constant 0 : index
    %14 = vector.load %arg2[%c0_11, %c0_12] : memref<4x64xf32, #tpu.memory_space<vmem>>, vector<4x64xf32>
    %cst_13 = arith.constant dense<0.000000e+00> : vector<4x1xf32>
    %15 = tpu.matmul %14, %7, %cst_13 {dimension_numbers = #tpu.dot_dimension_numbers<[1], [0], [0], [1], [0, 0, 1, 1], [], []>} : vector<4x64xf32>, vector<64x1xf32>, vector<4x1xf32> -> vector<4x1xf32>
    %cst_14 = arith.constant 0.000000e+00 : f32
    %16 = vector.broadcast %cst_14 : f32 to vector<4x1xf32>
    %17 = arith.maximumf %15, %16 : vector<4x1xf32>
    %c0_15 = arith.constant 0 : index
    %c0_16 = arith.constant 0 : index
    %18 = vector.load %arg3[%c0_15, %c0_16] : memref<64x4xf32, #tpu.memory_space<vmem>>, vector<64x4xf32>
    %cst_17 = arith.constant dense<0.000000e+00> : vector<64x1xf32>
    %19 = tpu.matmul %18, %17, %cst_17 {dimension_numbers = #tpu.dot_dimension_numbers<[1], [0], [0], [1], [0, 0, 1, 1], [], []>} : vector<64x4xf32>, vector<4x1xf32>, vector<64x1xf32> -> vector<64x1xf32>
    %20 = arith.addf %13, %19 : vector<64x1xf32>
    %21 = arith.negf %20 : vector<64x1xf32>
    %22 = math.exp %21 : vector<64x1xf32>
    %cst_18 = arith.constant 1.000000e+00 : f32
    %23 = vector.broadcast %cst_18 : f32 to vector<64x1xf32>
    %24 = arith.addf %23, %22 : vector<64x1xf32>
    %25 = arith.divf %23, %24 : vector<64x1xf32>
    %26 = vector.broadcast %25 : vector<64x1xf32> to vector<64x64xf32>
    %27 = arith.mulf %1, %26 : vector<64x64xf32>
    %cst_19 = arith.constant dense<0.000000e+00> : vector<64xf32>
    %28 = vector.multi_reduction <add>, %27, %cst_19 [0] : vector<64x64xf32> to vector<64xf32>
    %29 = vector.shape_cast %28 : vector<64xf32> to vector<1x64xf32>
    %cst_20 = arith.constant 6.400000e+01 : f32
    %30 = vector.broadcast %cst_20 : f32 to vector<1x64xf32>
    %31 = arith.divf %29, %30 : vector<1x64xf32>
    %cst_21 = arith.constant dense<0xFF800000> : vector<64xf32>
    %32 = vector.multi_reduction <maximumf>, %27, %cst_21 [0] : vector<64x64xf32> to vector<64xf32>
    %33 = vector.shape_cast %32 : vector<64xf32> to vector<1x64xf32>
    %34 = tpu.concatenate %31, %33 in 1 : vector<1x64xf32>, vector<1x64xf32> -> vector<1x128xf32>
    %c0_22 = arith.constant 0 : index
    %c0_23 = arith.constant 0 : index
    %35 = vector.load %arg4[%c0_22, %c0_23] : memref<128x64xf32, #tpu.memory_space<vmem>>, vector<128x64xf32>
    %cst_24 = arith.constant dense<0.000000e+00> : vector<1x64xf32>
    %36 = tpu.matmul %34, %35, %cst_24 {dimension_numbers = #tpu.dot_dimension_numbers<[1], [0], [0], [1], [0, 0, 1, 1], [], []>} : vector<1x128xf32>, vector<128x64xf32>, vector<1x64xf32> -> vector<1x64xf32>
    %37 = arith.negf %36 : vector<1x64xf32>
    %38 = math.exp %37 : vector<1x64xf32>
    %cst_25 = arith.constant 1.000000e+00 : f32
    %39 = vector.broadcast %cst_25 : f32 to vector<1x64xf32>
    %40 = arith.addf %39, %38 : vector<1x64xf32>
    %41 = arith.divf %39, %40 : vector<1x64xf32>
    %42 = vector.broadcast %41 : vector<1x64xf32> to vector<64x64xf32>
    %43 = arith.mulf %27, %42 : vector<64x64xf32>
    %cst_26 = arith.constant dense<0.000000e+00> : vector<64xf32>
    %44 = vector.multi_reduction <add>, %43, %cst_26 [1] : vector<64x64xf32> to vector<64xf32>
    %45 = vector.shape_cast %44 : vector<64xf32> to vector<64x1xf32>
    %cst_27 = arith.constant 1.562500e-02 : f32
    %46 = vector.broadcast %cst_27 : f32 to vector<64x1xf32>
    %47 = arith.mulf %45, %46 : vector<64x1xf32>
    %c0_28 = arith.constant 0 : index
    %c0_29 = arith.constant 0 : index
    %48 = vector.load %arg5[%c0_28, %c0_29] : memref<64x128xf32, #tpu.memory_space<vmem>>, vector<64x128xf32>
    %cst_30 = arith.constant dense<0.000000e+00> : vector<1x128xf32>
    %49 = tpu.matmul %47, %48, %cst_30 {dimension_numbers = #tpu.dot_dimension_numbers<[0], [0], [1], [1], [0, 1, 1, 1], [], []>} : vector<64x1xf32>, vector<64x128xf32>, vector<1x128xf32> -> vector<1x128xf32>
    %c0_31 = arith.constant 0 : index
    %c0_32 = arith.constant 0 : index
    %50 = vector.load %arg6[%c0_31, %c0_32] : memref<1x128xf32, #tpu.memory_space<vmem>>, vector<1x128xf32>
    %51 = arith.addf %49, %50 : vector<1x128xf32>
    %c0_33 = arith.constant 0 : index
    %c0_34 = arith.constant 0 : index
    %c0_35 = arith.constant 0 : index
    %52 = vector.load %arg7[%c0_33, %c0_34, %c0_35] : memref<1x1x128xf32, #tpu.memory_space<vmem>>, vector<1x1x128xf32>
    %53 = vector.shape_cast %52 : vector<1x1x128xf32> to vector<1x128xf32>
    %54 = vector.shape_cast %51 : vector<1x128xf32> to vector<1x1x128xf32>
    tpu.vector_store %arg7[%c0_33, %c0_34, %c0_35], %54 {strides = array<i32>} : memref<1x1x128xf32, #tpu.memory_space<vmem>>, vector<1x1x128xf32>,
    return
  }
  func.func @transform_0(%arg0: i32) -> (i32, i32, i32) {
    %c0_i32 = arith.constant 0 : i32
    %c0_i32_0 = arith.constant 0 : i32
    %c0_i32_1 = arith.constant 0 : i32
    return %arg0, %c0_i32, %c0_i32_0 : i32, i32, i32
  }
  func.func @transform_1(%arg0: i32) -> (i32, i32) {
    %c0_i32 = arith.constant 0 : i32
    %c0_i32_0 = arith.constant 0 : i32
    %c0_i32_1 = arith.constant 0 : i32
    return %c0_i32, %c0_i32_0 : i32, i32
  }
  func.func @transform_2(%arg0: i32) -> (i32, i32) {
    %c0_i32 = arith.constant 0 : i32
    %c0_i32_0 = arith.constant 0 : i32
    %c0_i32_1 = arith.constant 0 : i32
    return %c0_i32, %c0_i32_0 : i32, i32
  }
  func.func @transform_3(%arg0: i32) -> (i32, i32) {
    %c0_i32 = arith.constant 0 : i32
    %c0_i32_0 = arith.constant 0 : i32
    %c0_i32_1 = arith.constant 0 : i32
    return %c0_i32, %c0_i32_0 : i32, i32
  }
  func.func @transform_4(%arg0: i32) -> (i32, i32) {
    %c0_i32 = arith.constant 0 : i32
    %c0_i32_0 = arith.constant 0 : i32
    %c0_i32_1 = arith.constant 0 : i32
    return %c0_i32, %c0_i32_0 : i32, i32
  }
  func.func @transform_5(%arg0: i32) -> (i32, i32) {
    %c0_i32 = arith.constant 0 : i32
    %c0_i32_0 = arith.constant 0 : i32
    %c0_i32_1 = arith.constant 0 : i32
    return %c0_i32, %c0_i32_0 : i32, i32
  }
  func.func @transform_6(%arg0: i32) -> (i32, i32, i32) {
    %c0_i32 = arith.constant 0 : i32
    %c0_i32_0 = arith.constant 0 : i32
    %c0_i32_1 = arith.constant 0 : i32
    return %arg0, %c0_i32, %c0_i32_0 : i32, i32, i32
  }
}

</mosaic_0001>

<llo_original>
// kernel: apply.1
$region0: #{apply.1}
  #allocation0 [shape = 'u32[]', space=smem, size = 0x4, offset = 0x4, fixed_abs, tag = 'smem constant byte address 0x4 - core index']
  #allocation1 [shape = 'u32[144,128]{1,0:T(1,128)}', space=vmem, size = 0x12000, scoped, tag = 'internal scratch']
  %s0 = inlined_call_operand.vmem [shape: f32[2,64,64], index: 0, kind: input, shape index: {}]
  %s1 = inlined_call_operand.hbm [shape: f32[4,64], index: 1, kind: input, shape index: {}]
  %s2 = inlined_call_operand.vmem [shape: f32[64,4], index: 2, kind: input, shape index: {}]
  %s3 = inlined_call_operand.vmem [shape: f32[128,64], index: 3, kind: input, shape index: {}]
  %s4 = inlined_call_operand.vmem [shape: f32[64,128], index: 4, kind: input, shape index: {}]
  %s5 = inlined_call_operand.vmem [shape: f32[1,128], index: 5, kind: input, shape index: {}]
  %s6 = inlined_call_operand.hbm [shape: f32[2,1,128], index: 6, kind: output, shape index: {}]
  %s7 = sld [smem:[#allocation0]]
  $region61: #{apply.1} parent=0
    _
  %s9 = ssub.s32 1, %s7
  %s10 = scalar_select 0, %s9, %s7
  $region1: #{apply.1} parent=0
    #allocation2 [shape = 'u8[2048]{0}', space=vmem, size = 0x800, scoped, tag = 'input window, operand 1, single buffered']
    #allocation3 [shape = 's32[2]{0}', space=sflag, size = 0x8, scoped, tag = 'scoped memory for apply.1']
    #allocation4 [shape = 's32[2]{0}', space=sflag, size = 0x8, scoped, tag = 'scoped memory for apply.1']
    #allocation5 [shape = 'u8[1024]{0}', space=vmem, size = 0x400, scoped, tag = 'output window, operand 0']
    %11 = vsyncpa [#allocation3], 0
    %12 = vsyncpa [#allocation4], 0
    %s13 = scalar_lea.sflag [#allocation4], 1
    %14 = vsyncpa %s13, 0
    loop: start=0, step=1, limit=4
    $region2: #{apply.1} parent=1 // loop_pre_header
      _
    $region3: #{apply.1} parent=1 // loop_header
      %s16 = sphi 0, %s20
      %p17 = scmp.ge.s32.totalorder %s16, 4
      %s26 = sphi 0, %s28
      %s29 = sphi 0, %s26
      %s30 = sphi 0, %s29
      %s46 = sphi 0, %s30
      %s50 = sphi 0, %s50
      %s52 = sphi 0, %s50
      %s53 = sphi 0, %s52
      %s67 = sphi 0, %s53
      %s71 = sphi 0, %s71
      %s73 = sphi 0, %s71
      %s74 = sphi 0, %s73
      %s88 = sphi 0, %s74
      %s92 = sphi 0, %s92
      %s94 = sphi 0, %s92
      %s95 = sphi 0, %s94
      %s109 = sphi 0, %s95
      %s113 = sphi 0, %s113
      %s115 = sphi 0, %s113
      %s116 = sphi 0, %s115
      %s130 = sphi 0, %s116
      %s134 = sphi 0, %s134
      %s136 = sphi 0, %s134
      %s137 = sphi 0, %s136
      %s151 = sphi 0, %s137
      %s157 = sphi 0, %s159
      %s160 = sphi 0, %s157
      %s161 = sphi 0, %s160
      %s177 = sphi 0, %s161
    $region4: #{apply.1} parent=1 // loop_header_branch
      %19 = sbr.rel (%p17) target = $region8
    $region5: #{apply.1} parent=1 // loop_body
      %s21 = ssub.s32 %s16, 1
      %s22 = ssub.s32 %s16, 2
      %s23 = sadd.s32 %s16, 1
      %s24 = ssub.s32 %s16, %s23
      %p25 = scmp.eq.s32.totalorder %s24, 0
      %s27 = sadd.s32 %s26, 1
      %s28 = scalar_select %p25, %s26, %s27
      %p31 = pneg %p25
      %p32 = scmp.eq.s32.totalorder %s16, 1
      %p33 = por %p31, %p32
      %p34 = scmp.ne.s32.totalorder %s26, %s29
      %p35 = scmp.eq.s32.totalorder %s16, 0
      %p36 = por %p34, %p35
      %p37 = scmp.ne.s32.totalorder %s26, %s29
      %p38 = scmp.eq.s32.totalorder %s21, 1
      %p39 = por %p37, %p38
      %p40 = scmp.ne.s32.totalorder %s29, %s30
      %p41 = scmp.eq.s32.totalorder %s21, 0
      %p42 = por %p40, %p41
      %p43 = scmp.ne.s32.totalorder %s29, %s30
      %p44 = scmp.eq.s32.totalorder %s22, 1
      %p45 = por %p43, %p44
      %p47 = scmp.ne.s32.totalorder %s30, %s46
      %p48 = scmp.eq.s32.totalorder %s22, 0
      %p49 = por %p47, %p48
      %s51 = sadd.s32 %s50, 1
      %p54 = scmp.eq.s32.totalorder %s16, 1
      %p55 = scmp.ne.s32.totalorder %s50, %s52
      %p56 = scmp.eq.s32.totalorder %s16, 0
      %p57 = por %p55, %p56
      %p58 = scmp.ne.s32.totalorder %s50, %s52
      %p59 = scmp.eq.s32.totalorder %s21, 1
      %p60 = por %p58, %p59
      %p61 = scmp.ne.s32.totalorder %s52, %s53
      %p62 = scmp.eq.s32.totalorder %s21, 0
      %p63 = por %p61, %p62
      %p64 = scmp.ne.s32.totalorder %s52, %s53
      %p65 = scmp.eq.s32.totalorder %s22, 1
      %p66 = por %p64, %p65
      %p68 = scmp.ne.s32.totalorder %s53, %s67
      %p69 = scmp.eq.s32.totalorder %s22, 0
      %p70 = por %p68, %p69
      %s72 = sadd.s32 %s71, 1
      %p75 = scmp.eq.s32.totalorder %s16, 1
      %p76 = scmp.ne.s32.totalorder %s71, %s73
      %p77 = scmp.eq.s32.totalorder %s16, 0
      %p78 = por %p76, %p77
      %p79 = scmp.ne.s32.totalorder %s71, %s73
      %p80 = scmp.eq.s32.totalorder %s21, 1
      %p81 = por %p79, %p80
      %p82 = scmp.ne.s32.totalorder %s73, %s74
      %p83 = scmp.eq.s32.totalorder %s21, 0
      %p84 = por %p82, %p83
      %p85 = scmp.ne.s32.totalorder %s73, %s74
      %p86 = scmp.eq.s32.totalorder %s22, 1
      %p87 = por %p85, %p86
      %p89 = scmp.ne.s32.totalorder %s74, %s88
      %p90 = scmp.eq.s32.totalorder %s22, 0
      %p91 = por %p89, %p90
      %s93 = sadd.s32 %s92, 1
      %p96 = scmp.eq.s32.totalorder %s16, 1
      %p97 = scmp.ne.s32.totalorder %s92, %s94
      %p98 = scmp.eq.s32.totalorder %s16, 0
      %p99 = por %p97, %p98
      %p100 = scmp.ne.s32.totalorder %s92, %s94
      %p101 = scmp.eq.s32.totalorder %s21, 1
      %p102 = por %p100, %p101
      %p103 = scmp.ne.s32.totalorder %s94, %s95
      %p104 = scmp.eq.s32.totalorder %s21, 0
      %p105 = por %p103, %p104
      %p106 = scmp.ne.s32.totalorder %s94, %s95
      %p107 = scmp.eq.s32.totalorder %s22, 1
      %p108 = por %p106, %p107
      %p110 = scmp.ne.s32.totalorder %s95, %s109
      %p111 = scmp.eq.s32.totalorder %s22, 0
      %p112 = por %p110, %p111
      %s114 = sadd.s32 %s113, 1
      %p117 = scmp.eq.s32.totalorder %s16, 1
      %p118 = scmp.ne.s32.totalorder %s113, %s115
      %p119 = scmp.eq.s32.totalorder %s16, 0
      %p120 = por %p118, %p119
      %p121 = scmp.ne.s32.totalorder %s113, %s115
      %p122 = scmp.eq.s32.totalorder %s21, 1
      %p123 = por %p121, %p122
      %p124 = scmp.ne.s32.totalorder %s115, %s116
      %p125 = scmp.eq.s32.totalorder %s21, 0
      %p126 = por %p124, %p125
      %p127 = scmp.ne.s32.totalorder %s115, %s116
      %p128 = scmp.eq.s32.totalorder %s22, 1
      %p129 = por %p127, %p128
      %p131 = scmp.ne.s32.totalorder %s116, %s130
      %p132 = scmp.eq.s32.totalorder %s22, 0
      %p133 = por %p131, %p132
      %s135 = sadd.s32 %s134, 1
      %p138 = scmp.eq.s32.totalorder %s16, 1
      %p139 = scmp.ne.s32.totalorder %s134, %s136
      %p140 = scmp.eq.s32.totalorder %s16, 0
      %p141 = por %p139, %p140
      %p142 = scmp.ne.s32.totalorder %s134, %s136
      %p143 = scmp.eq.s32.totalorder %s21, 1
      %p144 = por %p142, %p143
      %p145 = scmp.ne.s32.totalorder %s136, %s137
      %p146 = scmp.eq.s32.totalorder %s21, 0
      %p147 = por %p145, %p146
      %p148 = scmp.ne.s32.totalorder %s136, %s137
      %p149 = scmp.eq.s32.totalorder %s22, 1
      %p150 = por %p148, %p149
      %p152 = scmp.ne.s32.totalorder %s137, %s151
      %p153 = scmp.eq.s32.totalorder %s22, 0
      %p154 = por %p152, %p153
      %s155 = ssub.s32 %s16, %s23
      %p156 = scmp.eq.s32.totalorder %s155, 0
      %s158 = sadd.s32 %s157, 1
      %s159 = scalar_select %p156, %s157, %s158
      %p162 = pneg %p156
      %p163 = scmp.eq.s32.totalorder %s16, 1
      %p164 = por %p162, %p163
      %p165 = scmp.ne.s32.totalorder %s157, %s160
      %p166 = scmp.eq.s32.totalorder %s16, 0
      %p167 = por %p165, %p166
      %p168 = scmp.ne.s32.totalorder %s157, %s160
      %p169 = scmp.eq.s32.totalorder %s21, 1
      %p170 = por %p168, %p169
      %p171 = scmp.ne.s32.totalorder %s160, %s161
      %p172 = scmp.eq.s32.totalorder %s21, 0
      %p173 = por %p171, %p172
      %p174 = scmp.ne.s32.totalorder %s160, %s161
      %p175 = scmp.eq.s32.totalorder %s22, 1
      %p176 = por %p174, %p175
      %p178 = scmp.ne.s32.totalorder %s161, %s177
      %p179 = scmp.eq.s32.totalorder %s22, 0
      %p180 = por %p178, %p179
      %p181 = scmp.le.s32.totalorder 1, %s16
      %p182 = scmp.lt.s32.totalorder %s16, 3
      %p183 = pnand %p181, %p182
      %p184 = pneg %p183
      // Predicated region
      $region9: #{apply.1} parent=5 // pred_check
        _
      $region10: #{apply.1} parent=5 // pred_check_branch
        %186 = sbr.rel (%p183) target = $region12
      $region11: #{apply.1} parent=5 // pred_region
        %s187 = ssub.s32 %s16, 1
        // Predicated region
        $region13: #{apply.1} parent=11 // pred_check
          %p188 = pneg %p63
        $region14: #{apply.1} parent=11 // pred_check_branch
          %190 = sbr.rel (%p188) target = $region16
        $region15: #{apply.1} parent=11 // pred_region
          %s192 = ssub.s32 64, 64
          %193 = vsyncadd [#allocation3], %s192
          %s195 = sshll.u32 [#allocation2], 4
          %s196 = int_to_ptr.vmem [resolvable:$true] %s195
          %198 = dma.hbm_to_vmem [thread:$0]  %s1, 64, %s196, [#allocation3]
        $region16: #{apply.1} parent=11 // pred_fallthru
          _
        // Predicated region
        $region17: #{apply.1} parent=11 // pred_check
          %p199 = pneg %p84
        $region18: #{apply.1} parent=11 // pred_check_branch
          %201 = sbr.rel (%p199) target = $region20
        $region19: #{apply.1} parent=11 // pred_region
          _
        $region20: #{apply.1} parent=11 // pred_fallthru
          _
        // Predicated region
        $region21: #{apply.1} parent=11 // pred_check
          %p202 = pneg %p105
        $region22: #{apply.1} parent=11 // pred_check_branch
          %204 = sbr.rel (%p202) target = $region24
        $region23: #{apply.1} parent=11 // pred_region
          _
        $region24: #{apply.1} parent=11 // pred_fallthru
          _
        // Predicated region
        $region25: #{apply.1} parent=11 // pred_check
          %p205 = pneg %p126
        $region26: #{apply.1} parent=11 // pred_check_branch
          %207 = sbr.rel (%p205) target = $region28
        $region27: #{apply.1} parent=11 // pred_region
          _
        $region28: #{apply.1} parent=11 // pred_fallthru
          _
        // Predicated region
        $region29: #{apply.1} parent=11 // pred_check
          %p208 = pneg %p147
        $region30: #{apply.1} parent=11 // pred_check_branch
          %210 = sbr.rel (%p208) target = $region32
        $region31: #{apply.1} parent=11 // pred_region
          _
        $region32: #{apply.1} parent=11 // pred_fallthru
          _
      $region12: #{apply.1} parent=5 // pred_fallthru
        _
      %p211 = scmp.lt.s32.totalorder %s16, 2
      // Predicated region
      $region33: #{apply.1} parent=5 // pred_check
        %p212 = pneg %p211
      $region34: #{apply.1} parent=5 // pred_check_branch
        %214 = sbr.rel (%p212) target = $region36
      $region35: #{apply.1} parent=5 // pred_region
        // Predicated region
        $region37: #{apply.1} parent=35 // pred_check
          %p215 = pneg %p36
        $region38: #{apply.1} parent=35 // pred_check_branch
          %217 = sbr.rel (%p215) target = $region40
        $region39: #{apply.1} parent=35 // pred_region
          %p218 = scmp.lt.s32.totalorder %s16, 1
          %s219 = scalar_select %p218, %s16, 1
          %s220 = smul.addr %s219, 8
          %s221 = smul.addr %s220, 8
          %s222 = scalar_lea.vmem %s0, %s221
        $region40: #{apply.1} parent=35 // pred_fallthru
          _
      $region36: #{apply.1} parent=5 // pred_fallthru
        _
      %p223 = scmp.le.s32.totalorder 1, %s16
      %p224 = scmp.lt.s32.totalorder %s16, 3
      %p225 = pnand %p223, %p224
      %p226 = pneg %p225
      // Predicated region
      $region41: #{apply.1} parent=5 // pred_check
        _
      $region42: #{apply.1} parent=5 // pred_check_branch
        %228 = sbr.rel (%p225) target = $region44
      $region43: #{apply.1} parent=5 // pred_region
        %s229 = ssub.s32 %s16, 1
        // Predicated region
        $region45: #{apply.1} parent=43 // pred_check
          %p230 = pneg %p63
        $region46: #{apply.1} parent=43 // pred_check_branch
          %232 = sbr.rel (%p230) target = $region48
        $region47: #{apply.1} parent=43 // pred_region
          %233 = dma.done [#allocation3], 64
        $region48: #{apply.1} parent=43 // pred_fallthru
          _
        %p234 = scmp.lt.s32.totalorder %s21, 1
        %s235 = scalar_select %p234, %s21, 1
        %s236 = smul.addr %s235, 8
        %s237 = smul.addr %s236, 8
        %s238 = scalar_lea.vmem %s0, %s237
        %p239 = pneg %p42
        %p240 = pneg %p39
        %p241 = pneg %p63
        %p242 = pneg %p60
        %p243 = pneg %p84
        %p244 = pneg %p81
        %p245 = pneg %p105
        %p246 = pneg %p102
        %p247 = pneg %p126
        %p248 = pneg %p123
        %p249 = pneg %p147
        %p250 = pneg %p144
        %p251 = pneg %p173
        %p252 = pneg %p170
        %s253 = sand.u32 %s160, 1
        %s254 = scalar_lea.sflag [#allocation4], %s253
        %s255 = sand.u32 %s160, 1
        %s256 = scalar_lea.vmem [#allocation5], %s255
        %p257 = scmp.lt.s32.totalorder %s21, 1
        %s258 = scalar_select %p257, %s21, 1
        %s259 = smul.addr %s258, 8
        %s260 = smul.addr %s259, 8
        %s261 = scalar_lea.vmem %s0, %s260
        %v262 = vld [vmem:[%s261] sm:$0xff]
        %v263 = vld [vmem:[%s261 + $0x8] sm:$0xff]
        %v264 = vld [vmem:[%s261 + $0x10] sm:$0xff]
        %v265 = vld [vmem:[%s261 + $0x18] sm:$0xff]
        %v266 = vld [vmem:[%s261 + $0x20] sm:$0xff]
        %v267 = vld [vmem:[%s261 + $0x28] sm:$0xff]
        %v268 = vld [vmem:[%s261 + $0x30] sm:$0xff]
        %v269 = vld [vmem:[%s261 + $0x38] sm:$0xff]
        %vm270 = vcmask 523264
        %v271 = vsel %vm270, %v262, 0.0
        %272 = vadd.xlane.f32.xlu0 %v271
        %v273 = vpop.xlane.xlu0 %272
        %v274 = vsel %vm270, %v263, 0.0
        %275 = vadd.xlane.f32.xlu0 %v274
        %v276 = vpop.xlane.xlu0 %275
        %v277 = vsel %vm270, %v264, 0.0
        %278 = vadd.xlane.f32.xlu0 %v277
        %v279 = vpop.xlane.xlu0 %278
        %v280 = vsel %vm270, %v265, 0.0
        %281 = vadd.xlane.f32.xlu0 %v280
        %v282 = vpop.xlane.xlu0 %281
        %v283 = vsel %vm270, %v266, 0.0
        %284 = vadd.xlane.f32.xlu0 %v283
        %v285 = vpop.xlane.xlu0 %284
        %v286 = vsel %vm270, %v267, 0.0
        %287 = vadd.xlane.f32.xlu0 %v286
        %v288 = vpop.xlane.xlu0 %287
        %v289 = vsel %vm270, %v268, 0.0
        %290 = vadd.xlane.f32.xlu0 %v289
        %v291 = vpop.xlane.xlu0 %290
        %v292 = vsel %vm270, %v269, 0.0
        %293 = vadd.xlane.f32.xlu0 %v292
        %v294 = vpop.xlane.xlu0 %293
        %v295 = vmul.f32 %v273, 0.015625
        %v296 = vmul.f32 %v276, 0.015625
        %v297 = vmul.f32 %v279, 0.015625
        %v298 = vmul.f32 %v282, 0.015625
        %v299 = vmul.f32 %v285, 0.015625
        %v300 = vmul.f32 %v288, 0.015625
        %v301 = vmul.f32 %v291, 0.015625
        %v302 = vmul.f32 %v294, 0.015625
        %v303 = vsel %vm270, %v262, -inf
        %304 = vmax.xlane.f32.xlu0 %v303
        %v305 = vpop.xlane.xlu0 %304
        %v306 = vsel %vm270, %v263, -inf
        %307 = vmax.xlane.f32.xlu0 %v306
        %v308 = vpop.xlane.xlu0 %307
        %v309 = vsel %vm270, %v264, -inf
        %310 = vmax.xlane.f32.xlu0 %v309
        %v311 = vpop.xlane.xlu0 %310
        %v312 = vsel %vm270, %v265, -inf
        %313 = vmax.xlane.f32.xlu0 %v312
        %v314 = vpop.xlane.xlu0 %313
        %v315 = vsel %vm270, %v266, -inf
        %316 = vmax.xlane.f32.xlu0 %v315
        %v317 = vpop.xlane.xlu0 %316
        %v318 = vsel %vm270, %v267, -inf
        %319 = vmax.xlane.f32.xlu0 %v318
        %v320 = vpop.xlane.xlu0 %319
        %v321 = vsel %vm270, %v268, -inf
        %322 = vmax.xlane.f32.xlu0 %v321
        %v323 = vpop.xlane.xlu0 %322
        %v324 = vsel %vm270, %v269, -inf
        %325 = vmax.xlane.f32.xlu0 %v324
        %v326 = vpop.xlane.xlu0 %325
        %v327 = vld [vmem:[#allocation2] sm:$0xf]
        %v329 = vsel %vm270, %v327, 0
        %331 = vmatprep.subr.mxu0 0.0
        %332 = vmatpush1.msra.mxu0 0.0
        %333 = vmatprep.subr.mxu0 0.0
        %334 = vmatpush1.msra.mxu0 0.0
        %335 = vmatprep.subr.mxu0 0.0
        %336 = vmatpush1.msra.mxu0 0.0
        %337 = vmatprep.subr.mxu0 0.0
        %338 = vmatpush1.msra.mxu0 0.0
        %339 = vmatprep.subr.mxu0 0.0
        %340 = vmatpush1.msra.mxu0 0.0
        %341 = vmatprep.subr.mxu0 0.0
        %342 = vmatpush1.msra.mxu0 0.0
        %343 = vmatprep.subr.mxu0 0.0
        %344 = vmatpush1.msra.mxu0 0.0
        %345 = vmatprep.subr.mxu0 0.0
        %346 = vmatpush1.msra.mxu0 0.0
        %347 = vmatprep.subr.mxu0 0.0
        %348 = vmatpush1.msra.mxu0 %v302
        %349 = vmatprep.subr.mxu0 0.0
        %350 = vmatpush1.msra.mxu0 %v301
        %351 = vmatprep.subr.mxu0 0.0
        %352 = vmatpush1.msra.mxu0 %v300
        %353 = vmatprep.subr.mxu0 0.0
        %354 = vmatpush1.msra.mxu0 %v299
        %355 = vmatprep.subr.mxu0 0.0
        %356 = vmatpush1.msra.mxu0 %v298
        %357 = vmatprep.subr.mxu0 0.0
        %358 = vmatpush1.msra.mxu0 %v297
        %359 = vmatprep.subr.mxu0 0.0
        %360 = vmatpush1.msra.mxu0 %v296
        %361 = vmatprep.subr.mxu0 0.0
        %362 = vmatpush1.msra.mxu0 %v295
        %363 = vmatprep.subr.mxu0 0.0
        %364 = vmatpush2.msra.mxu0 0.0
        %365 = vmatprep.subr.mxu0 0.0
        %366 = vmatpush2.msra.mxu0 0.0
        %367 = vmatprep.subr.mxu0 0.0
        %368 = vmatpush2.msra.mxu0 0.0
        %369 = vmatprep.subr.mxu0 0.0
        %370 = vmatpush2.msra.mxu0 0.0
        %371 = vmatprep.subr.mxu0 0.0
        %372 = vmatpush2.msra.mxu0 0.0
        %373 = vmatprep.subr.mxu0 0.0
        %374 = vmatpush2.msra.mxu0 0.0
        %375 = vmatprep.subr.mxu0 0.0
        %376 = vmatpush2.msra.mxu0 0.0
        %377 = vmatprep.subr.mxu0 0.0
        %378 = vmatpush2.msra.mxu0 0.0
        %379 = vmatprep.subr.mxu0 0.0
        %380 = vmatpush2.msra.mxu0 0.0
        %381 = vmatprep.subr.mxu0 0.0
        %382 = vmatpush2.msra.mxu0 0.0
        %383 = vmatprep.subr.mxu0 0.0
        %384 = vmatpush2.msra.mxu0 0.0
        %385 = vmatprep.subr.mxu0 0.0
        %386 = vmatpush2.msra.mxu0 0.0
        %387 = vmatprep.subr.mxu0 0.0
        %388 = vmatpush2.msra.mxu0 0.0
        %389 = vmatprep.subr.mxu0 0.0
        %390 = vmatpush2.msra.mxu0 0.0
        %391 = vmatprep.subr.mxu0 0.0
        %392 = vmatpush2.msra.mxu0 0.0
        %393 = vmatprep.subr.mxu0 0.0
        %394 = vmatpush2.msra.mxu0 0.0
        %395 = vmatprep.mubr.f32.mxu0 0.0
        %396 = vmatmul.mubr.f32.gmra.mxu0 %v329
        %v397 = vpop.f32.mrf.mxu0
        %v398 = vadd.f32 0.0, %v397
        %v399 = vpop.f32.mrf.mxu0
        %400 = vdwg.mxu0
        %v401 = vmax.f32 %v398, 0.0
        %v402 = vld [vmem:[%s2] sm:$0xff]
        %v403 = vld [vmem:[%s2 + $0x8] sm:$0xff]
        %v404 = vld [vmem:[%s2 + $0x10] sm:$0xff]
        %v405 = vld [vmem:[%s2 + $0x18] sm:$0xff]
        %v406 = vld [vmem:[%s2 + $0x20] sm:$0xff]
        %v407 = vld [vmem:[%s2 + $0x28] sm:$0xff]
        %v408 = vld [vmem:[%s2 + $0x30] sm:$0xff]
        %v409 = vld [vmem:[%s2 + $0x38] sm:$0xff]
        %410 = vmatprep.subr.mxu0 0.0
        %411 = vmatpush1.msra.mxu0 0.0
        %412 = vmatprep.subr.mxu0 0.0
        %413 = vmatpush1.msra.mxu0 0.0
        %414 = vmatprep.subr.mxu0 0.0
        %415 = vmatpush1.msra.mxu0 0.0
        %416 = vmatprep.subr.mxu0 0.0
        %417 = vmatpush1.msra.mxu0 0.0
        %418 = vmatprep.subr.mxu0 0.0
        %419 = vmatpush1.msra.mxu0 0.0
        %420 = vmatprep.subr.mxu0 0.0
        %421 = vmatpush1.msra.mxu0 0.0
        %422 = vmatprep.subr.mxu0 0.0
        %423 = vmatpush1.msra.mxu0 0.0
        %424 = vmatprep.subr.mxu0 0.0
        %425 = vmatpush1.msra.mxu0 0.0
        %426 = vmatprep.subr.mxu0 0.0
        %427 = vmatpush1.msra.mxu0 %v326
        %428 = vmatprep.subr.mxu0 0.0
        %429 = vmatpush1.msra.mxu0 %v323
        %430 = vmatprep.subr.mxu0 0.0
        %431 = vmatpush1.msra.mxu0 %v320
        %432 = vmatprep.subr.mxu0 0.0
        %433 = vmatpush1.msra.mxu0 %v317
        %434 = vmatprep.subr.mxu0 0.0
        %435 = vmatpush1.msra.mxu0 %v314
        %436 = vmatprep.subr.mxu0 0.0
        %437 = vmatpush1.msra.mxu0 %v311
        %438 = vmatprep.subr.mxu0 0.0
        %439 = vmatpush1.msra.mxu0 %v308
        %440 = vmatprep.subr.mxu0 0.0
        %441 = vmatpush1.msra.mxu0 %v305
        %442 = vmatprep.subr.mxu0 0.0
        %443 = vmatpush2.msra.mxu0 0.0
        %444 = vmatprep.subr.mxu0 0.0
        %445 = vmatpush2.msra.mxu0 0.0
        %446 = vmatprep.subr.mxu0 0.0
        %447 = vmatpush2.msra.mxu0 0.0
        %448 = vmatprep.subr.mxu0 0.0
        %449 = vmatpush2.msra.mxu0 0.0
        %450 = vmatprep.subr.mxu0 0.0
        %451 = vmatpush2.msra.mxu0 0.0
        %452 = vmatprep.subr.mxu0 0.0
        %453 = vmatpush2.msra.mxu0 0.0
        %454 = vmatprep.subr.mxu0 0.0
        %455 = vmatpush2.msra.mxu0 0.0
        %456 = vmatprep.subr.mxu0 0.0
        %457 = vmatpush2.msra.mxu0 0.0
        %458 = vmatprep.subr.mxu0 0.0
        %459 = vmatpush2.msra.mxu0 0.0
        %460 = vmatprep.subr.mxu0 0.0
        %461 = vmatpush2.msra.mxu0 0.0
        %462 = vmatprep.subr.mxu0 0.0
        %463 = vmatpush2.msra.mxu0 0.0
        %464 = vmatprep.subr.mxu0 0.0
        %465 = vmatpush2.msra.mxu0 0.0
        %466 = vmatprep.subr.mxu0 0.0
        %467 = vmatpush2.msra.mxu0 0.0
        %468 = vmatprep.subr.mxu0 0.0
        %469 = vmatpush2.msra.mxu0 0.0
        %470 = vmatprep.subr.mxu0 0.0
        %471 = vmatpush2.msra.mxu0 0.0
        %472 = vmatprep.subr.mxu0 0.0
        %473 = vmatpush2.msra.mxu0 0.0
        %474 = vmatprep.mubr.f32.mxu0 0.0
        %475 = vmatmul.mubr.f32.gmra.mxu0 %v329
        %v476 = vpop.f32.mrf.mxu0
        %v477 = vadd.f32 0.0, %v476
        %v478 = vpop.f32.mrf.mxu0
        %479 = vdwg.mxu0
        %v480 = vmax.f32 %v477, 0.0
        %vm481 = vcmask 31744
        %v483 = vsel %vm481, %v402, 0
        %v486 = vsel %vm481, %v403, 0
        %v489 = vsel %vm481, %v404, 0
        %v492 = vsel %vm481, %v405, 0
        %v495 = vsel %vm481, %v406, 0
        %v498 = vsel %vm481, %v407, 0
        %v501 = vsel %vm481, %v408, 0
        %v504 = vsel %vm481, %v409, 0
        %vm506 = vcmask 1043456
        %v508 = vsel %vm506, %v480, 0
        %510 = vmatprep.subr.mxu0 0.0
        %511 = vmatpush1.msra.mxu0 0.0
        %512 = vmatprep.subr.mxu0 0.0
        %513 = vmatpush1.msra.mxu0 0.0
        %514 = vmatprep.subr.mxu0 0.0
        %515 = vmatpush1.msra.mxu0 0.0
        %516 = vmatprep.subr.mxu0 0.0
        %517 = vmatpush1.msra.mxu0 0.0
        %518 = vmatprep.subr.mxu0 0.0
        %519 = vmatpush1.msra.mxu0 0.0
        %520 = vmatprep.subr.mxu0 0.0
        %521 = vmatpush1.msra.mxu0 0.0
        %522 = vmatprep.subr.mxu0 0.0
        %523 = vmatpush1.msra.mxu0 0.0
        %524 = vmatprep.subr.mxu0 0.0
        %525 = vmatpush1.msra.mxu0 0.0
        %526 = vmatprep.subr.mxu0 0.0
        %527 = vmatpush1.msra.mxu0 0.0
        %528 = vmatprep.subr.mxu0 0.0
        %529 = vmatpush1.msra.mxu0 0.0
        %530 = vmatprep.subr.mxu0 0.0
        %531 = vmatpush1.msra.mxu0 0.0
        %532 = vmatprep.subr.mxu0 0.0
        %533 = vmatpush1.msra.mxu0 0.0
        %534 = vmatprep.subr.mxu0 0.0
        %535 = vmatpush1.msra.mxu0 0.0
        %536 = vmatprep.subr.mxu0 0.0
        %537 = vmatpush1.msra.mxu0 0.0
        %538 = vmatprep.subr.mxu0 0.0
        %539 = vmatpush1.msra.mxu0 0.0
        %540 = vmatprep.subr.mxu0 0.0
        %541 = vmatpush1.msra.mxu0 %v508
        %542 = vmatprep.subr.mxu0 0.0
        %543 = vmatpush2.msra.mxu0 0.0
        %544 = vmatprep.subr.mxu0 0.0
        %545 = vmatpush2.msra.mxu0 0.0
        %546 = vmatprep.subr.mxu0 0.0
        %547 = vmatpush2.msra.mxu0 0.0
        %548 = vmatprep.subr.mxu0 0.0
        %549 = vmatpush2.msra.mxu0 0.0
        %550 = vmatprep.subr.mxu0 0.0
        %551 = vmatpush2.msra.mxu0 0.0
        %552 = vmatprep.subr.mxu0 0.0
        %553 = vmatpush2.msra.mxu0 0.0
        %554 = vmatprep.subr.mxu0 0.0
        %555 = vmatpush2.msra.mxu0 0.0
        %556 = vmatprep.subr.mxu0 0.0
        %557 = vmatpush2.msra.mxu0 0.0
        %558 = vmatprep.subr.mxu0 0.0
        %559 = vmatpush2.msra.mxu0 0.0
        %560 = vmatprep.subr.mxu0 0.0
        %561 = vmatpush2.msra.mxu0 0.0
        %562 = vmatprep.subr.mxu0 0.0
        %563 = vmatpush2.msra.mxu0 0.0
        %564 = vmatprep.subr.mxu0 0.0
        %565 = vmatpush2.msra.mxu0 0.0
        %566 = vmatprep.subr.mxu0 0.0
        %567 = vmatpush2.msra.mxu0 0.0
        %568 = vmatprep.subr.mxu0 0.0
        %569 = vmatpush2.msra.mxu0 0.0
        %570 = vmatprep.subr.mxu0 0.0
        %571 = vmatpush2.msra.mxu0 0.0
        %572 = vmatprep.subr.mxu0 0.0
        %573 = vmatpush2.msra.mxu0 0.0
        %574 = vmatprep.mubr.f32.mxu0 0.0
        %575 = vmatmul.mubr.f32.gmra.mxu0 %v483
        %v576 = vpop.f32.mrf.mxu0
        %v577 = vadd.f32 0.0, %v576
        %v578 = vpop.f32.mrf.mxu0
        %579 = vmatprep.mubr.f32.mxu0 0.0
        %580 = vmatmul.mubr.f32.gmra.mxu0 %v486
        %v581 = vpop.f32.mrf.mxu0
        %v582 = vadd.f32 0.0, %v581
        %v583 = vpop.f32.mrf.mxu0
        %584 = vmatprep.mubr.f32.mxu0 0.0
        %585 = vmatmul.mubr.f32.gmra.mxu0 %v489
        %v586 = vpop.f32.mrf.mxu0
        %v587 = vadd.f32 0.0, %v586
        %v588 = vpop.f32.mrf.mxu0
        %589 = vmatprep.mubr.f32.mxu0 0.0
        %590 = vmatmul.mubr.f32.gmra.mxu0 %v492
        %v591 = vpop.f32.mrf.mxu0
        %v592 = vadd.f32 0.0, %v591
        %v593 = vpop.f32.mrf.mxu0
        %594 = vmatprep.mubr.f32.mxu0 0.0
        %595 = vmatmul.mubr.f32.gmra.mxu0 %v495
        %v596 = vpop.f32.mrf.mxu0
        %v597 = vadd.f32 0.0, %v596
        %v598 = vpop.f32.mrf.mxu0
        %599 = vmatprep.mubr.f32.mxu0 0.0
        %600 = vmatmul.mubr.f32.gmra.mxu0 %v498
        %v601 = vpop.f32.mrf.mxu0
        %v602 = vadd.f32 0.0, %v601
        %v603 = vpop.f32.mrf.mxu0
        %604 = vmatprep.mubr.f32.mxu0 0.0
        %605 = vmatmul.mubr.f32.gmra.mxu0 %v501
        %v606 = vpop.f32.mrf.mxu0
        %v607 = vadd.f32 0.0, %v606
        %v608 = vpop.f32.mrf.mxu0
        %609 = vmatprep.mubr.f32.mxu0 0.0
        %610 = vmatmul.mubr.f32.gmra.mxu0 %v504
        %v611 = vpop.f32.mrf.mxu0
        %v612 = vadd.f32 0.0, %v611
        %v613 = vpop.f32.mrf.mxu0
        %614 = vdwg.mxu0
        %v616 = vsel %vm506, %v401, 0
        %618 = vmatprep.subr.mxu0 0.0
        %619 = vmatpush1.msra.mxu0 0.0
        %620 = vmatprep.subr.mxu0 0.0
        %621 = vmatpush1.msra.mxu0 0.0
        %622 = vmatprep.subr.mxu0 0.0
        %623 = vmatpush1.msra.mxu0 0.0
        %624 = vmatprep.subr.mxu0 0.0
        %625 = vmatpush1.msra.mxu0 0.0
        %626 = vmatprep.subr.mxu0 0.0
        %627 = vmatpush1.msra.mxu0 0.0
        %628 = vmatprep.subr.mxu0 0.0
        %629 = vmatpush1.msra.mxu0 0.0
        %630 = vmatprep.subr.mxu0 0.0
        %631 = vmatpush1.msra.mxu0 0.0
        %632 = vmatprep.subr.mxu0 0.0
        %633 = vmatpush1.msra.mxu0 0.0
        %634 = vmatprep.subr.mxu0 0.0
        %635 = vmatpush1.msra.mxu0 0.0
        %636 = vmatprep.subr.mxu0 0.0
        %637 = vmatpush1.msra.mxu0 0.0
        %638 = vmatprep.subr.mxu0 0.0
        %639 = vmatpush1.msra.mxu0 0.0
        %640 = vmatprep.subr.mxu0 0.0
        %641 = vmatpush1.msra.mxu0 0.0
        %642 = vmatprep.subr.mxu0 0.0
        %643 = vmatpush1.msra.mxu0 0.0
        %644 = vmatprep.subr.mxu0 0.0
        %645 = vmatpush1.msra.mxu0 0.0
        %646 = vmatprep.subr.mxu0 0.0
        %647 = vmatpush1.msra.mxu0 0.0
        %648 = vmatprep.subr.mxu0 0.0
        %649 = vmatpush1.msra.mxu0 %v616
        %650 = vmatprep.subr.mxu0 0.0
        %651 = vmatpush2.msra.mxu0 0.0
        %652 = vmatprep.subr.mxu0 0.0
        %653 = vmatpush2.msra.mxu0 0.0
        %654 = vmatprep.subr.mxu0 0.0
        %655 = vmatpush2.msra.mxu0 0.0
        %656 = vmatprep.subr.mxu0 0.0
        %657 = vmatpush2.msra.mxu0 0.0
        %658 = vmatprep.subr.mxu0 0.0
        %659 = vmatpush2.msra.mxu0 0.0
        %660 = vmatprep.subr.mxu0 0.0
        %661 = vmatpush2.msra.mxu0 0.0
        %662 = vmatprep.subr.mxu0 0.0
        %663 = vmatpush2.msra.mxu0 0.0
        %664 = vmatprep.subr.mxu0 0.0
        %665 = vmatpush2.msra.mxu0 0.0
        %666 = vmatprep.subr.mxu0 0.0
        %667 = vmatpush2.msra.mxu0 0.0
        %668 = vmatprep.subr.mxu0 0.0
        %669 = vmatpush2.msra.mxu0 0.0
        %670 = vmatprep.subr.mxu0 0.0
        %671 = vmatpush2.msra.mxu0 0.0
        %672 = vmatprep.subr.mxu0 0.0
        %673 = vmatpush2.msra.mxu0 0.0
        %674 = vmatprep.subr.mxu0 0.0
        %675 = vmatpush2.msra.mxu0 0.0
        %676 = vmatprep.subr.mxu0 0.0
        %677 = vmatpush2.msra.mxu0 0.0
        %678 = vmatprep.subr.mxu0 0.0
        %679 = vmatpush2.msra.mxu0 0.0
        %680 = vmatprep.subr.mxu0 0.0
        %681 = vmatpush2.msra.mxu0 0.0
        %682 = vmatprep.mubr.f32.mxu0 0.0
        %683 = vmatmul.mubr.f32.gmra.mxu0 %v483
        %v684 = vpop.f32.mrf.mxu0
        %v685 = vadd.f32 %v577, %v684
        %v686 = vpop.f32.mrf.mxu0
        %687 = vmatprep.mubr.f32.mxu0 0.0
        %688 = vmatmul.mubr.f32.gmra.mxu0 %v486
        %v689 = vpop.f32.mrf.mxu0
        %v690 = vadd.f32 %v582, %v689
        %v691 = vpop.f32.mrf.mxu0
        %692 = vmatprep.mubr.f32.mxu0 0.0
        %693 = vmatmul.mubr.f32.gmra.mxu0 %v489
        %v694 = vpop.f32.mrf.mxu0
        %v695 = vadd.f32 %v587, %v694
        %v696 = vpop.f32.mrf.mxu0
        %697 = vmatprep.mubr.f32.mxu0 0.0
        %698 = vmatmul.mubr.f32.gmra.mxu0 %v492
        %v699 = vpop.f32.mrf.mxu0
        %v700 = vadd.f32 %v592, %v699
        %v701 = vpop.f32.mrf.mxu0
        %702 = vmatprep.mubr.f32.mxu0 0.0
        %703 = vmatmul.mubr.f32.gmra.mxu0 %v495
        %v704 = vpop.f32.mrf.mxu0
        %v705 = vadd.f32 %v597, %v704
        %v706 = vpop.f32.mrf.mxu0
        %707 = vmatprep.mubr.f32.mxu0 0.0
        %708 = vmatmul.mubr.f32.gmra.mxu0 %v498
        %v709 = vpop.f32.mrf.mxu0
        %v710 = vadd.f32 %v602, %v709
        %v711 = vpop.f32.mrf.mxu0
        %712 = vmatprep.mubr.f32.mxu0 0.0
        %713 = vmatmul.mubr.f32.gmra.mxu0 %v501
        %v714 = vpop.f32.mrf.mxu0
        %v715 = vadd.f32 %v607, %v714
        %v716 = vpop.f32.mrf.mxu0
        %717 = vmatprep.mubr.f32.mxu0 0.0
        %718 = vmatmul.mubr.f32.gmra.mxu0 %v504
        %v719 = vpop.f32.mrf.mxu0
        %v720 = vadd.f32 %v612, %v719
        %v721 = vpop.f32.mrf.mxu0
        %722 = vdwg.mxu0
        %v723 = vxor.u32 %v685, 2147483648
        %v724 = vxor.u32 %v690, 2147483648
        %v725 = vxor.u32 %v695, 2147483648
        %v726 = vxor.u32 %v700, 2147483648
        %v727 = vxor.u32 %v705, 2147483648
        %v728 = vxor.u32 %v710, 2147483648
        %v729 = vxor.u32 %v715, 2147483648
        %v730 = vxor.u32 %v720, 2147483648
        %v731 = vmul.f32 %v723, 1.442695
        %v732 = vpow.pop %v731
        %v733 = vmul.f32 %v724, 1.442695
        %v734 = vpow.pop %v733
        %v735 = vmul.f32 %v725, 1.442695
        %v736 = vpow.pop %v735
        %v737 = vmul.f32 %v726, 1.442695
        %v738 = vpow.pop %v737
        %v739 = vmul.f32 %v727, 1.442695
        %v740 = vpow.pop %v739
        %v741 = vmul.f32 %v728, 1.442695
        %v742 = vpow.pop %v741
        %v743 = vmul.f32 %v729, 1.442695
        %v744 = vpow.pop %v743
        %v745 = vmul.f32 %v730, 1.442695
        %v746 = vpow.pop %v745
        %v747 = vadd.f32 %v732, 1.0
        %v748 = vadd.f32 %v734, 1.0
        %v749 = vadd.f32 %v736, 1.0
        %v750 = vadd.f32 %v738, 1.0
        %v751 = vadd.f32 %v740, 1.0
        %v752 = vadd.f32 %v742, 1.0
        %v753 = vadd.f32 %v744, 1.0
        %v754 = vadd.f32 %v746, 1.0
        %v755 = vrcp.pop %v747
        %v756 = vmul.f32 1.0, %v755
        %v757 = vrcp.pop %v748
        %v758 = vmul.f32 1.0, %v757
        %v759 = vrcp.pop %v749
        %v760 = vmul.f32 1.0, %v759
        %v761 = vrcp.pop %v750
        %v762 = vmul.f32 1.0, %v761
        %v763 = vrcp.pop %v751
        %v764 = vmul.f32 1.0, %v763
        %v765 = vrcp.pop %v752
        %v766 = vmul.f32 1.0, %v765
        %v767 = vrcp.pop %v753
        %v768 = vmul.f32 1.0, %v767
        %v769 = vrcp.pop %v754
        %v770 = vmul.f32 1.0, %v769
        %772 = vset.pattern.permute.xlu0 0
        %773 = vperm.xlu0 %772, %v756
        %v774 = vpop.permute.xlu0 %773
        %777 = vset.pattern.permute.xlu0 0
        %778 = vperm.xlu0 %777, %v758
        %v779 = vpop.permute.xlu0 %778
        %782 = vset.pattern.permute.xlu0 0
        %783 = vperm.xlu0 %782, %v760
        %v784 = vpop.permute.xlu0 %783
        %787 = vset.pattern.permute.xlu0 0
        %788 = vperm.xlu0 %787, %v762
        %v789 = vpop.permute.xlu0 %788
        %792 = vset.pattern.permute.xlu0 0
        %793 = vperm.xlu0 %792, %v764
        %v794 = vpop.permute.xlu0 %793
        %797 = vset.pattern.permute.xlu0 0
        %798 = vperm.xlu0 %797, %v766
        %v799 = vpop.permute.xlu0 %798
        %802 = vset.pattern.permute.xlu0 0
        %803 = vperm.xlu0 %802, %v768
        %v804 = vpop.permute.xlu0 %803
        %807 = vset.pattern.permute.xlu0 0
        %808 = vperm.xlu0 %807, %v770
        %v809 = vpop.permute.xlu0 %808
        %v811 = vmul.f32 %v262, %v774
        %v812 = vmul.f32 %v263, %v779
        %v813 = vmul.f32 %v264, %v784
        %v814 = vmul.f32 %v265, %v789
        %v815 = vmul.f32 %v266, %v794
        %v816 = vmul.f32 %v267, %v799
        %v817 = vmul.f32 %v268, %v804
        %v818 = vmul.f32 %v269, %v809
        %v819 = vsel %vm270, %v811, 0.0
        %v820 = vsel %vm270, %v812, 0.0
        %v821 = vadd.f32 %v819, %v820
        %v822 = vsel %vm270, %v813, 0.0
        %v823 = vadd.f32 %v821, %v822
        %v824 = vsel %vm270, %v814, 0.0
        %v825 = vadd.f32 %v823, %v824
        %v826 = vsel %vm270, %v815, 0.0
        %v827 = vadd.f32 %v825, %v826
        %v828 = vsel %vm270, %v816, 0.0
        %v829 = vadd.f32 %v827, %v828
        %v830 = vsel %vm270, %v817, 0.0
        %v831 = vadd.f32 %v829, %v830
        %v832 = vsel %vm270, %v818, 0.0
        %v833 = vadd.f32 %v831, %v832
        %v834 = vrot.slane %v833, 4
        %v835 = vadd.f32 %v833, %v834
        %v836 = vrot.slane %v835, 2
        %v837 = vadd.f32 %v835, %v836
        %v838 = vrot.slane %v837, 1
        %v839 = vadd.f32 %v837, %v838
        %v840 = vrcp.pop 64.0
        %v841 = vmul.f32 %v839, %v840
        %v842 = vsel %vm270, %v811, -inf
        %v843 = vsel %vm270, %v812, -inf
        %v844 = vsel %vm270, %v813, -inf
        %v845 = vsel %vm270, %v814, -inf
        %v846 = vsel %vm270, %v815, -inf
        %v847 = vmax.f32 %v842, %v846
        %v848 = vsel %vm270, %v816, -inf
        %v849 = vmax.f32 %v843, %v848
        %v850 = vsel %vm270, %v817, -inf
        %v851 = vmax.f32 %v844, %v850
        %v852 = vsel %vm270, %v818, -inf
        %v853 = vmax.f32 %v845, %v852
        %v854 = vmax.f32 %v847, %v849
        %v855 = vmax.f32 %v851, %v853
        %v856 = vmax.f32 %v854, %v855
        %v857 = vrot.slane %v856, 4
        %v858 = vmax.f32 %v856, %v857
        %v859 = vrot.slane %v858, 2
        %v860 = vmax.f32 %v858, %v859
        %v861 = vrot.slane %v860, 1
        %v862 = vmax.f32 %v860, %v861
        %864 = vrot.lane.b32.xlu0 %v862, 64
        %v865 = vpop.permute.xlu0 %864
        %v867 = vsel %vm270, %v841, %v865
        %v868 = vld [vmem:[%s3] sm:$0xff]
        %v869 = vld [vmem:[%s3 + $0x8] sm:$0xff]
        %v870 = vld [vmem:[%s3 + $0x10] sm:$0xff]
        %v871 = vld [vmem:[%s3 + $0x18] sm:$0xff]
        %v872 = vld [vmem:[%s3 + $0x20] sm:$0xff]
        %v873 = vld [vmem:[%s3 + $0x28] sm:$0xff]
        %v874 = vld [vmem:[%s3 + $0x30] sm:$0xff]
        %v875 = vld [vmem:[%s3 + $0x38] sm:$0xff]
        %v876 = vld [vmem:[%s3 + $0x40] sm:$0xff]
        %v877 = vld [vmem:[%s3 + $0x48] sm:$0xff]
        %v878 = vld [vmem:[%s3 + $0x50] sm:$0xff]
        %v879 = vld [vmem:[%s3 + $0x58] sm:$0xff]
        %v880 = vld [vmem:[%s3 + $0x60] sm:$0xff]
        %v881 = vld [vmem:[%s3 + $0x68] sm:$0xff]
        %v882 = vld [vmem:[%s3 + $0x70] sm:$0xff]
        %v883 = vld [vmem:[%s3 + $0x78] sm:$0xff]
        %884 = vmatprep.subr.mxu0 0.0
        %885 = vmatpush1.msra.mxu0 %v883
        %886 = vmatprep.subr.mxu0 0.0
        %887 = vmatpush1.msra.mxu0 %v882
        %888 = vmatprep.subr.mxu0 0.0
        %889 = vmatpush1.msra.mxu0 %v881
        %890 = vmatprep.subr.mxu0 0.0
        %891 = vmatpush1.msra.mxu0 %v880
        %892 = vmatprep.subr.mxu0 0.0
        %893 = vmatpush1.msra.mxu0 %v879
        %894 = vmatprep.subr.mxu0 0.0
        %895 = vmatpush1.msra.mxu0 %v878
        %896 = vmatprep.subr.mxu0 0.0
        %897 = vmatpush1.msra.mxu0 %v877
        %898 = vmatprep.subr.mxu0 0.0
        %899 = vmatpush1.msra.mxu0 %v876
        %900 = vmatprep.subr.mxu0 0.0
        %901 = vmatpush1.msra.mxu0 %v875
        %902 = vmatprep.subr.mxu0 0.0
        %903 = vmatpush1.msra.mxu0 %v874
        %904 = vmatprep.subr.mxu0 0.0
        %905 = vmatpush1.msra.mxu0 %v873
        %906 = vmatprep.subr.mxu0 0.0
        %907 = vmatpush1.msra.mxu0 %v872
        %908 = vmatprep.subr.mxu0 0.0
        %909 = vmatpush1.msra.mxu0 %v871
        %910 = vmatprep.subr.mxu0 0.0
        %911 = vmatpush1.msra.mxu0 %v870
        %912 = vmatprep.subr.mxu0 0.0
        %913 = vmatpush1.msra.mxu0 %v869
        %914 = vmatprep.subr.mxu0 0.0
        %915 = vmatpush1.msra.mxu0 %v868
        %916 = vmatprep.subr.mxu0 0.0
        %917 = vmatpush2.msra.mxu0 0.0
        %918 = vmatprep.subr.mxu0 0.0
        %919 = vmatpush2.msra.mxu0 0.0
        %920 = vmatprep.subr.mxu0 0.0
        %921 = vmatpush2.msra.mxu0 0.0
        %922 = vmatprep.subr.mxu0 0.0
        %923 = vmatpush2.msra.mxu0 0.0
        %924 = vmatprep.subr.mxu0 0.0
        %925 = vmatpush2.msra.mxu0 0.0
        %926 = vmatprep.subr.mxu0 0.0
        %927 = vmatpush2.msra.mxu0 0.0
        %928 = vmatprep.subr.mxu0 0.0
        %929 = vmatpush2.msra.mxu0 0.0
        %930 = vmatprep.subr.mxu0 0.0
        %931 = vmatpush2.msra.mxu0 0.0
        %932 = vmatprep.subr.mxu0 0.0
        %933 = vmatpush2.msra.mxu0 0.0
        %934 = vmatprep.subr.mxu0 0.0
        %935 = vmatpush2.msra.mxu0 0.0
        %936 = vmatprep.subr.mxu0 0.0
        %937 = vmatpush2.msra.mxu0 0.0
        %938 = vmatprep.subr.mxu0 0.0
        %939 = vmatpush2.msra.mxu0 0.0
        %940 = vmatprep.subr.mxu0 0.0
        %941 = vmatpush2.msra.mxu0 0.0
        %942 = vmatprep.subr.mxu0 0.0
        %943 = vmatpush2.msra.mxu0 0.0
        %944 = vmatprep.subr.mxu0 0.0
        %945 = vmatpush2.msra.mxu0 0.0
        %946 = vmatprep.subr.mxu0 0.0
        %947 = vmatpush2.msra.mxu0 0.0
        %948 = vmatprep.mubr.f32.mxu0 0.0
        %949 = vmatmul.mubr.f32.gmra.mxu0 %v867
        %v950 = vpop.f32.mrf.mxu0
        %v951 = vadd.f32 0.0, %v950
        %v952 = vpop.f32.mrf.mxu0
        %953 = vdwg.mxu0
        %v954 = vxor.u32 %v951, 2147483648
        %v955 = vmul.f32 %v954, 1.442695
        %v956 = vpow.pop %v955
        %v957 = vadd.f32 %v956, 1.0
        %v958 = vrcp.pop %v957
        %v959 = vmul.f32 1.0, %v958
        %v960 = vlaneseq
        %v961 = vshrl.u32 %v960, 7
        %v962 = vsub.s32 0, %v961
        %v963 = vrot.slane %v959, %v962
        %v964 = vmul.f32 %v811, %v963
        %v965 = vmul.f32 %v812, %v963
        %v966 = vmul.f32 %v813, %v963
        %v967 = vmul.f32 %v814, %v963
        %v968 = vmul.f32 %v815, %v963
        %v969 = vmul.f32 %v816, %v963
        %v970 = vmul.f32 %v817, %v963
        %v971 = vmul.f32 %v818, %v963
        %v972 = vsel %vm270, %v964, 0.0
        %973 = vadd.xlane.f32.xlu0 %v972
        %v974 = vpop.xlane.xlu0 %973
        %v975 = vsel %vm270, %v965, 0.0
        %976 = vadd.xlane.f32.xlu0 %v975
        %v977 = vpop.xlane.xlu0 %976
        %v978 = vsel %vm270, %v966, 0.0
        %979 = vadd.xlane.f32.xlu0 %v978
        %v980 = vpop.xlane.xlu0 %979
        %v981 = vsel %vm270, %v967, 0.0
        %982 = vadd.xlane.f32.xlu0 %v981
        %v983 = vpop.xlane.xlu0 %982
        %v984 = vsel %vm270, %v968, 0.0
        %985 = vadd.xlane.f32.xlu0 %v984
        %v986 = vpop.xlane.xlu0 %985
        %v987 = vsel %vm270, %v969, 0.0
        %988 = vadd.xlane.f32.xlu0 %v987
        %v989 = vpop.xlane.xlu0 %988
        %v990 = vsel %vm270, %v970, 0.0
        %991 = vadd.xlane.f32.xlu0 %v990
        %v992 = vpop.xlane.xlu0 %991
        %v993 = vsel %vm270, %v971, 0.0
        %994 = vadd.xlane.f32.xlu0 %v993
        %v995 = vpop.xlane.xlu0 %994
        %v996 = vmul.f32 %v974, 0.015625
        %v997 = vmul.f32 %v977, 0.015625
        %v998 = vmul.f32 %v980, 0.015625
        %v999 = vmul.f32 %v983, 0.015625
        %v1000 = vmul.f32 %v986, 0.015625
        %v1001 = vmul.f32 %v989, 0.015625
        %v1002 = vmul.f32 %v992, 0.015625
        %v1003 = vmul.f32 %v995, 0.015625
        %v1004 = vld [vmem:[%s4] sm:$0xff]
        %v1005 = vld [vmem:[%s4 + $0x8] sm:$0xff]
        %v1006 = vld [vmem:[%s4 + $0x10] sm:$0xff]
        %v1007 = vld [vmem:[%s4 + $0x18] sm:$0xff]
        %v1008 = vld [vmem:[%s4 + $0x20] sm:$0xff]
        %v1009 = vld [vmem:[%s4 + $0x28] sm:$0xff]
        %v1010 = vld [vmem:[%s4 + $0x30] sm:$0xff]
        %v1011 = vld [vmem:[%s4 + $0x38] sm:$0xff]
        %v1012 = vld [vmem:[%s5] sm:$0x1]
        %1013 = vxpose.xlu0.b32.start [1/16] %v996, 128
        %1014 = vxpose.xlu0.b32.cont [2/16] %v997, 128
        %1015 = vxpose.xlu0.b32.cont [3/16] %v998, 128
        %1016 = vxpose.xlu0.b32.cont [4/16] %v999, 128
        %1017 = vxpose.xlu0.b32.cont [5/16] %v1000, 128
        %1018 = vxpose.xlu0.b32.cont [6/16] %v1001, 128
        %1019 = vxpose.xlu0.b32.cont [7/16] %v1002, 128
        %1020 = vxpose.xlu0.b32.cont [8/16] %v1003, 128
        %1021 = vxpose.xlu0.b32.cont [9/16] 0.0, 128
        %1022 = vxpose.xlu0.b32.cont [10/16] 0.0, 128
        %1023 = vxpose.xlu0.b32.cont [11/16] 0.0, 128
        %1024 = vxpose.xlu0.b32.cont [12/16] 0.0, 128
        %1025 = vxpose.xlu0.b32.cont [13/16] 0.0, 128
        %1026 = vxpose.xlu0.b32.cont [14/16] 0.0, 128
        %1027 = vxpose.xlu0.b32.cont [15/16] 0.0, 128
        %1028 = vxpose.xlu0.b32.end [16/16] 0.0, 128
        %v1029 = vpop.trf.xlu0
        %v1030 = vpop.trf.xlu0
        %v1031 = vpop.trf.xlu0
        %v1032 = vpop.trf.xlu0
        %v1033 = vpop.trf.xlu0
        %v1034 = vpop.trf.xlu0
        %v1035 = vpop.trf.xlu0
        %v1036 = vpop.trf.xlu0
        %v1037 = vpop.trf.xlu0
        %v1038 = vpop.trf.xlu0
        %v1039 = vpop.trf.xlu0
        %v1040 = vpop.trf.xlu0
        %v1041 = vpop.trf.xlu0
        %v1042 = vpop.trf.xlu0
        %v1043 = vpop.trf.xlu0
        %v1044 = vpop.trf.xlu0
        %v1046 = vsel %vm270, %v1029, 0
        %1048 = vmatprep.subr.mxu0 0.0
        %1049 = vmatpush1.msra.mxu0 0.0
        %1050 = vmatprep.subr.mxu0 0.0
        %1051 = vmatpush1.msra.mxu0 0.0
        %1052 = vmatprep.subr.mxu0 0.0
        %1053 = vmatpush1.msra.mxu0 0.0
        %1054 = vmatprep.subr.mxu0 0.0
        %1055 = vmatpush1.msra.mxu0 0.0
        %1056 = vmatprep.subr.mxu0 0.0
        %1057 = vmatpush1.msra.mxu0 0.0
        %1058 = vmatprep.subr.mxu0 0.0
        %1059 = vmatpush1.msra.mxu0 0.0
        %1060 = vmatprep.subr.mxu0 0.0
        %1061 = vmatpush1.msra.mxu0 0.0
        %1062 = vmatprep.subr.mxu0 0.0
        %1063 = vmatpush1.msra.mxu0 0.0
        %1064 = vmatprep.subr.mxu0 0.0
        %1065 = vmatpush1.msra.mxu0 %v1011
        %1066 = vmatprep.subr.mxu0 0.0
        %1067 = vmatpush1.msra.mxu0 %v1010
        %1068 = vmatprep.subr.mxu0 0.0
        %1069 = vmatpush1.msra.mxu0 %v1009
        %1070 = vmatprep.subr.mxu0 0.0
        %1071 = vmatpush1.msra.mxu0 %v1008
        %1072 = vmatprep.subr.mxu0 0.0
        %1073 = vmatpush1.msra.mxu0 %v1007
        %1074 = vmatprep.subr.mxu0 0.0
        %1075 = vmatpush1.msra.mxu0 %v1006
        %1076 = vmatprep.subr.mxu0 0.0
        %1077 = vmatpush1.msra.mxu0 %v1005
        %1078 = vmatprep.subr.mxu0 0.0
        %1079 = vmatpush1.msra.mxu0 %v1004
        %1080 = vmatprep.subr.mxu0 0.0
        %1081 = vmatpush2.msra.mxu0 0.0
        %1082 = vmatprep.subr.mxu0 0.0
        %1083 = vmatpush2.msra.mxu0 0.0
        %1084 = vmatprep.subr.mxu0 0.0
        %1085 = vmatpush2.msra.mxu0 0.0
        %1086 = vmatprep.subr.mxu0 0.0
        %1087 = vmatpush2.msra.mxu0 0.0
        %1088 = vmatprep.subr.mxu0 0.0
        %1089 = vmatpush2.msra.mxu0 0.0
        %1090 = vmatprep.subr.mxu0 0.0
        %1091 = vmatpush2.msra.mxu0 0.0
        %1092 = vmatprep.subr.mxu0 0.0
        %1093 = vmatpush2.msra.mxu0 0.0
        %1094 = vmatprep.subr.mxu0 0.0
        %1095 = vmatpush2.msra.mxu0 0.0
        %1096 = vmatprep.subr.mxu0 0.0
        %1097 = vmatpush2.msra.mxu0 0.0
        %1098 = vmatprep.subr.mxu0 0.0
        %1099 = vmatpush2.msra.mxu0 0.0
        %1100 = vmatprep.subr.mxu0 0.0
        %1101 = vmatpush2.msra.mxu0 0.0
        %1102 = vmatprep.subr.mxu0 0.0
        %1103 = vmatpush2.msra.mxu0 0.0
        %1104 = vmatprep.subr.mxu0 0.0
        %1105 = vmatpush2.msra.mxu0 0.0
        %1106 = vmatprep.subr.mxu0 0.0
        %1107 = vmatpush2.msra.mxu0 0.0
        %1108 = vmatprep.subr.mxu0 0.0
        %1109 = vmatpush2.msra.mxu0 0.0
        %1110 = vmatprep.subr.mxu0 0.0
        %1111 = vmatpush2.msra.mxu0 0.0
        %1112 = vmatprep.mubr.f32.mxu0 0.0
        %1113 = vmatmul.mubr.f32.gmra.mxu0 %v1046
        %v1114 = vpop.f32.mrf.mxu0
        %v1115 = vadd.f32 %v1012, %v1114
        %v1116 = vpop.f32.mrf.mxu0
        %1117 = vdwg.mxu0
        %1118 = vst [vmem:[%s256] sm:$0x1] %v1115
        %s1119 = sand.u32 %s160, 1
        %s1120 = scalar_lea.sflag [#allocation4], %s1119
        %s1121 = sand.u32 %s160, 1
        %s1122 = scalar_lea.vmem [#allocation5], %s1121
        // Predicated region
        $region49: #{apply.1} parent=43 // pred_check
          %p1123 = pneg %p170
        $region50: #{apply.1} parent=43 // pred_check_branch
          %1125 = sbr.rel (%p1123) target = $region52
        $region51: #{apply.1} parent=43 // pred_region
          %s1127 = ssub.s32 16, 16
          %1128 = vsyncadd %s1120, %s1127
          %s1129 = smul.addr %s21, 16
          %s1130 = scalar_lea.hbm %s6, %s1129
          %s1132 = sshll.u32 %s1122, 4
          %s1133 = int_to_ptr.vmem [resolvable:$true] %s1132
          %1135 = dma.vmem_to_hbm [thread:$0]  %s1133, 16, %s1130, %s1120
        $region52: #{apply.1} parent=43 // pred_fallthru
          _
      $region44: #{apply.1} parent=5 // pred_fallthru
        _
      %p1136 = scmp.le.s32.totalorder 2, %s16
      // Predicated region
      $region53: #{apply.1} parent=5 // pred_check
        %p1137 = pneg %p1136
      $region54: #{apply.1} parent=5 // pred_check_branch
        %1139 = sbr.rel (%p1137) target = $region56
      $region55: #{apply.1} parent=5 // pred_region
        %s1140 = ssub.s32 %s16, 2
        // Predicated region
        $region57: #{apply.1} parent=55 // pred_check
          %p1141 = pneg %p176
        $region58: #{apply.1} parent=55 // pred_check_branch
          %1143 = sbr.rel (%p1141) target = $region60
        $region59: #{apply.1} parent=55 // pred_region
          %s1144 = sand.u32 %s161, 1
          %s1145 = scalar_lea.sflag [#allocation4], %s1144
          %s1146 = sand.u32 %s161, 1
          %s1147 = scalar_lea.vmem [#allocation5], %s1146
          %1148 = dma.done %s1145, 16
        $region60: #{apply.1} parent=55 // pred_fallthru
          _
      $region56: #{apply.1} parent=5 // pred_fallthru
        _
    $region6: #{apply.1} parent=1 // loop_footer
      %s20 = sadd.s32 1, %s16
    $region7: #{apply.1} parent=1 // loop_footer_branch
      %15 = sbr.rel target = $region3
    $region8: #{apply.1} parent=1 // loop_exit
      _
    %1149 = vsyncpa [#allocation3], 1
    %s1150 = scalar_lea.sflag [#allocation3], 1
    %1151 = vsyncpa %s1150, 1
    %1152 = vsyncpa [#allocation4], 1
    %s1153 = scalar_lea.sflag [#allocation4], 1
    %1154 = vsyncpa %s1153, 1

</llo_original>
